<compile_context>
chip_gen: v7x
topology: tpu7x:2x2x1
jax: 0.10.0
libtpu: 0.0.40
codegen_flags: <defaults>
</compile_context>

<pallas_src>
import jax
import jax.numpy as jnp
from jax.experimental import pallas as pl
from jax.experimental.pallas import tpu as pltpu


def _round_up(n, m):
    return ((n + m - 1) // m) * m


def _logreg_kernel(x_ref, w_ref, b_ref, o_ref):
    # x: [TB, D], w: [D, Cpad], b: [1, Cpad], o: [TB, Cpad]
    logits = jnp.dot(x_ref[...], w_ref[...], preferred_element_type=jnp.float32)
    logits = logits + b_ref[...]                      # broadcast [1, Cpad] over rows
    e = jnp.exp(-logits)                              # EUP
    o_ref[...] = pl.reciprocal(1.0 + e, approx=True).astype(o_ref.dtype)  # EUP


def _choose_tb(B, D, Cpad):
    """Pick a batch tile that is a multiple of 8 and VMEM-safe on v5e/v6e/v7x."""
    tb = min(512, _round_up(B, 8))
    # f32 word budget (~16 MiB) for double-buffered x/out tiles + resident weight.
    budget_words = (16 * 1024 * 1024) // 4
    while tb > 8 and (2 * tb * (D + Cpad) + D * Cpad) > budget_words:
        tb = max(8, tb // 2)
    return _round_up(tb, 8)


def logistic_regression_forward(x, weight, bias):
    """x: [B, D] f32, weight: [C, D] f32 (PyTorch layout), bias: [C] f32 -> [B, C] f32."""
    B, D = x.shape
    C, _ = weight.shape

    # Lane-dense class axis.
    Cpad = _round_up(C, 128)
    # Batch tiling.
    TB = _choose_tb(B, D, Cpad)
    Bpad = _round_up(B, TB)

    # One-time wrapper-side layout work (parameters / padding; free in XLA).
    w_t = jnp.zeros((D, Cpad), dtype=jnp.float32).at[:, :C].set(weight.T)
    b2d = jnp.zeros((1, Cpad), dtype=jnp.float32).at[:, :C].set(bias)
    x_p = x if Bpad == B else jnp.pad(x, ((0, Bpad - B), (0, 0)))

    grid = (Bpad // TB,)

    out = pl.pallas_call(
        _logreg_kernel,
        out_shape=jax.ShapeDtypeStruct((Bpad, Cpad), jnp.float32),
        grid_spec=pl.GridSpec(
            grid=grid,
            in_specs=[
                pl.BlockSpec((TB, D), lambda i: (i, 0)),     # streamed batch tiles
                pl.BlockSpec((D, Cpad), lambda i: (0, 0)),   # resident weight
                pl.BlockSpec((1, Cpad), lambda i: (0, 0)),   # resident bias
            ],
            out_specs=pl.BlockSpec((TB, Cpad), lambda i: (i, 0)),
        ),
        compiler_params=pltpu.CompilerParams(
            dimension_semantics=("parallel",),
        ),
        cost_estimate=pl.CostEstimate(
            flops=2 * Bpad * D * Cpad,
            transcendentals=Bpad * Cpad,
            bytes_accessed=4 * (Bpad * D + D * Cpad + Cpad + Bpad * Cpad),
        ),
    )(x_p, w_t, b2d)

    return out[:B, :C]


if __name__ == "__main__":
    # Small shapes consistent with the module's forward: x is [batch, input_size]
    batch, input_size, num_classes = 8, 32, 4

    key = jax.random.PRNGKey(0)
    kx, kw, kb = jax.random.split(key, 3)

    x = jax.random.normal(kx, (batch, input_size), dtype=jnp.float32)
    # Deterministic init mimicking nn.Linear's uniform(-1/sqrt(D), 1/sqrt(D))
    bound = 1.0 / jnp.sqrt(jnp.float32(input_size))
    weight = jax.random.uniform(
        kw, (num_classes, input_size), dtype=jnp.float32, minval=-bound, maxval=bound
    )
    bias = jax.random.uniform(
        kb, (num_classes,), dtype=jnp.float32, minval=-bound, maxval=bound
    )

    out = logistic_regression_forward(x, weight, bias)
    out = jax.block_until_ready(out)

    # Reference check against plain JAX (approx reciprocal -> slightly looser tol)
    ref = jax.nn.sigmoid(x @ weight.T + bias)
    assert out.shape == (batch, num_classes)
    assert jnp.allclose(out, ref, atol=1e-2, rtol=1e-2), float(jnp.max(jnp.abs(out - ref)))

    print("KERNEL_OK")
</pallas_src>

<mosaic_0001>
module attributes {stable_mosaic.version = 11 : i64} {
  func.func @_logreg_kernel(%arg0: i32, %arg1: memref<8x32xf32, #tpu.memory_space<vmem>>, %arg2: memref<32x128xf32, #tpu.memory_space<vmem>>, %arg3: memref<1x128xf32, #tpu.memory_space<vmem>>, %arg4: memref<8x128xf32, #tpu.memory_space<vmem>>) attributes {dimension_semantics = [#tpu.dimension_semantics<parallel>], iteration_bounds = array<i64: 1>, scalar_prefetch = 0 : i64, scratch_operands = 0 : i64, tpu.core_type = #tpu.core_type<tc>, window_params = [{transform_indices = @transform_0, window_bounds = array<i64: 8, 32>}, {pipeline_mode = #tpu.pipeline_mode<synchronous>, transform_indices = @transform_1, window_bounds = array<i64: 32, 128>}, {pipeline_mode = #tpu.pipeline_mode<synchronous>, transform_indices = @transform_2, window_bounds = array<i64: 1, 128>}, {transform_indices = @transform_3, window_bounds = array<i64: 8, 128>}]} {
    %c0 = arith.constant 0 : index
    %c0_0 = arith.constant 0 : index
    %0 = vector.load %arg1[%c0, %c0_0] : memref<8x32xf32, #tpu.memory_space<vmem>>, vector<8x32xf32>
    %c0_1 = arith.constant 0 : index
    %c0_2 = arith.constant 0 : index
    %1 = vector.load %arg2[%c0_1, %c0_2] : memref<32x128xf32, #tpu.memory_space<vmem>>, vector<32x128xf32>
    %cst = arith.constant dense<0.000000e+00> : vector<8x128xf32>
    %2 = tpu.matmul %0, %1, %cst {dimension_numbers = #tpu.dot_dimension_numbers<[1], [0], [0], [1], [0, 0, 1, 1], [], []>} : vector<8x32xf32>, vector<32x128xf32>, vector<8x128xf32> -> vector<8x128xf32>
    %c0_3 = arith.constant 0 : index
    %c0_4 = arith.constant 0 : index
    %3 = vector.load %arg3[%c0_3, %c0_4] : memref<1x128xf32, #tpu.memory_space<vmem>>, vector<1x128xf32>
    %4 = vector.broadcast %3 : vector<1x128xf32> to vector<8x128xf32>
    %5 = arith.addf %2, %4 : vector<8x128xf32>
    %cst_5 = arith.constant 0.000000e+00 : f32
    %6 = vector.broadcast %cst_5 : f32 to vector<8x128xf32>
    %7 = arith.subf %6, %5 : vector<8x128xf32>
    %8 = math.exp %7 : vector<8x128xf32>
    %cst_6 = arith.constant 1.000000e+00 : f32
    %9 = vector.broadcast %cst_6 : f32 to vector<8x128xf32>
    %10 = arith.addf %9, %8 : vector<8x128xf32>
    %11 = tpu.reciprocal %10 {approx = true} : vector<8x128xf32> -> vector<8x128xf32>
    %c0_7 = arith.constant 0 : index
    %c0_8 = arith.constant 0 : index
    %12 = vector.load %arg4[%c0_7, %c0_8] : memref<8x128xf32, #tpu.memory_space<vmem>>, vector<8x128xf32>
    tpu.vector_store %arg4[%c0_7, %c0_8], %11 {strides = array<i32>} : memref<8x128xf32, #tpu.memory_space<vmem>>, vector<8x128xf32>,
    return
  }
  func.func @transform_0(%arg0: i32) -> (i32, i32) {
    %c0_i32 = arith.constant 0 : i32
    %c0_i32_0 = arith.constant 0 : i32
    return %arg0, %c0_i32 : i32, i32
  }
  func.func @transform_1(%arg0: i32) -> (i32, i32) {
    %c0_i32 = arith.constant 0 : i32
    %c0_i32_0 = arith.constant 0 : i32
    %c0_i32_1 = arith.constant 0 : i32
    return %c0_i32, %c0_i32_0 : i32, i32
  }
  func.func @transform_2(%arg0: i32) -> (i32, i32) {
    %c0_i32 = arith.constant 0 : i32
    %c0_i32_0 = arith.constant 0 : i32
    %c0_i32_1 = arith.constant 0 : i32
    return %c0_i32, %c0_i32_0 : i32, i32
  }
  func.func @transform_3(%arg0: i32) -> (i32, i32) {
    %c0_i32 = arith.constant 0 : i32
    %c0_i32_0 = arith.constant 0 : i32
    return %arg0, %c0_i32 : i32, i32
  }
}

</mosaic_0001>

<llo_original>
// kernel: tpu_custom_call.1
$region0: #{tpu_custom_call.1}
  #allocation0 [shape = 'u32[]', space=smem, size = 0x4, offset = 0x4, fixed_abs, tag = 'smem constant byte address 0x4 - core index']
  #allocation1 [shape = 'u32[144,128]{1,0:T(1,128)}', space=vmem, size = 0x12000, scoped, tag = 'internal scratch']
  %s0 = inlined_call_operand.hbm [shape: f32[8,32], index: 0, kind: input, shape index: {}]
  %s1 = inlined_call_operand.hbm [shape: f32[32,128], index: 1, kind: input, shape index: {}]
  %s2 = inlined_call_operand.vmem [shape: f32[1,128], index: 2, kind: input, shape index: {}]
  %s3 = inlined_call_operand.hbm [shape: f32[8,128], index: 3, kind: output, shape index: {}]
  %s4 = sld [smem:[#allocation0]]
  $region30: #{tpu_custom_call.1} parent=0
    _
  %s6 = ssub.s32 1, %s4
  %s7 = scalar_select 0, %s6, %s4
  $region1: #{tpu_custom_call.1} parent=0
    #allocation2 [shape = 'u8[4096]{0}', space=vmem, size = 0x1000, scoped, tag = 'input window, operand 0, single buffered']
    #allocation3 [shape = 's32[1]{0}', space=sflag, size = 0x4, scoped, tag = 'scoped memory for tpu_custom_call.1']
    #allocation4 [shape = 's32[1]{0}', space=sflag, size = 0x4, scoped, tag = 'scoped memory for tpu_custom_call.1']
    #allocation5 [shape = 'u8[16384]{0}', space=vmem, size = 0x4000, scoped, tag = 'input window, operand 1, single buffered']
    #allocation6 [shape = 's32[1]{0}', space=sflag, size = 0x4, scoped, tag = 'scoped memory for tpu_custom_call.1']
    #allocation7 [shape = 'u8[4096]{0}', space=vmem, size = 0x1000, scoped, tag = 'output window, operand 0, single buffered']
    %8 = vsyncpa [#allocation3], 0
    %9 = vsyncpa [#allocation6], 0
    %10 = vsyncpa [#allocation4], 0
    // Predicated region
    $region2: #{tpu_custom_call.1} parent=1 // pred_check
      _
    $region3: #{tpu_custom_call.1} parent=1 // pred_check_branch
      %12 = sbr.rel (0) target = $region5
    $region4: #{tpu_custom_call.1} parent=1 // pred_region
      %s14 = ssub.s32 128, 128
      %15 = vsyncadd [#allocation3], %s14
      %s17 = sshll.u32 [#allocation2], 4
      %s18 = int_to_ptr.vmem [resolvable:$true] %s17
      %20 = dma.hbm_to_vmem [thread:$0]  %s0, 128, %s18, [#allocation3]
    $region5: #{tpu_custom_call.1} parent=1 // pred_fallthru
      _
    // Predicated region
    $region6: #{tpu_custom_call.1} parent=1 // pred_check
      _
    $region7: #{tpu_custom_call.1} parent=1 // pred_check_branch
      %22 = sbr.rel (0) target = $region9
    $region8: #{tpu_custom_call.1} parent=1 // pred_region
      %s24 = ssub.s32 512, 512
      %25 = vsyncadd [#allocation6], %s24
      %s26 = sshll.u32 [#allocation5], 4
      %s27 = int_to_ptr.vmem [resolvable:$true] %s26
      %32 = dma.hbm_to_vmem [thread:$0]  %s1, 512, %s27, [#allocation6], 128, 128, 8
    $region9: #{tpu_custom_call.1} parent=1 // pred_fallthru
      _
    // Predicated region
    $region10: #{tpu_custom_call.1} parent=1 // pred_check
      _
    $region11: #{tpu_custom_call.1} parent=1 // pred_check_branch
      %34 = sbr.rel (0) target = $region13
    $region12: #{tpu_custom_call.1} parent=1 // pred_region
      _
    $region13: #{tpu_custom_call.1} parent=1 // pred_fallthru
      _
    // Predicated region
    $region14: #{tpu_custom_call.1} parent=1 // pred_check
      _
    $region15: #{tpu_custom_call.1} parent=1 // pred_check_branch
      %36 = sbr.rel (0) target = $region17
    $region16: #{tpu_custom_call.1} parent=1 // pred_region
      %37 = dma.done [#allocation3], 128
    $region17: #{tpu_custom_call.1} parent=1 // pred_fallthru
      _
    // Predicated region
    $region18: #{tpu_custom_call.1} parent=1 // pred_check
      _
    $region19: #{tpu_custom_call.1} parent=1 // pred_check_branch
      %39 = sbr.rel (0) target = $region21
    $region20: #{tpu_custom_call.1} parent=1 // pred_region
      %40 = dma.done [#allocation6], 512
    $region21: #{tpu_custom_call.1} parent=1 // pred_fallthru
      _
    %v41 = vld [vmem:[#allocation2] sm:$0xff]
    %v42 = vld [vmem:[#allocation5] sm:$0xff]
    %v43 = vld [vmem:[#allocation5 + $0x8] sm:$0xff]
    %v44 = vld [vmem:[#allocation5 + $0x10] sm:$0xff]
    %v45 = vld [vmem:[#allocation5 + $0x18] sm:$0xff]
    %v46 = vld [vmem:[%s2] sm:$0x1]
    %v48 = vlaneseq
    %v49 = vshrl.u32 %v48, 7
    %v50 = vsub.s32 0, %v49
    %v51 = vrot.slane %v46, %v50
    %vm53 = vcmask 261120
    %v55 = vsel %vm53, %v41, 0
    %57 = vmatprep.subr.mxu0 0.0
    %58 = vmatpush1.msra.mxu0 %v42
    %59 = vmatprep.subr.mxu0 0.0
    %60 = vmatpush1.msra.mxu0 %v43
    %61 = vmatprep.subr.mxu0 0.0
    %62 = vmatpush1.msra.mxu0 %v44
    %63 = vmatprep.subr.mxu0 0.0
    %64 = vmatpush1.msra.mxu0 %v45
    %65 = vmatprep.subr.mxu0 0.0
    %66 = vmatpush1.msra.mxu0 0.0
    %67 = vmatprep.subr.mxu0 0.0
    %68 = vmatpush1.msra.mxu0 0.0
    %69 = vmatprep.subr.mxu0 0.0
    %70 = vmatpush1.msra.mxu0 0.0
    %71 = vmatprep.subr.mxu0 0.0
    %72 = vmatpush1.msra.mxu0 0.0
    %73 = vmatprep.subr.mxu0 0.0
    %74 = vmatpush1.msra.mxu0 0.0
    %75 = vmatprep.subr.mxu0 0.0
    %76 = vmatpush1.msra.mxu0 0.0
    %77 = vmatprep.subr.mxu0 0.0
    %78 = vmatpush1.msra.mxu0 0.0
    %79 = vmatprep.subr.mxu0 0.0
    %80 = vmatpush1.msra.mxu0 0.0
    %81 = vmatprep.subr.mxu0 0.0
    %82 = vmatpush1.msra.mxu0 0.0
    %83 = vmatprep.subr.mxu0 0.0
    %84 = vmatpush1.msra.mxu0 0.0
    %85 = vmatprep.subr.mxu0 0.0
    %86 = vmatpush1.msra.mxu0 0.0
    %87 = vmatprep.subr.mxu0 0.0
    %88 = vmatpush1.msra.mxu0 0.0
    %89 = vmatprep.subr.mxu0 0.0
    %90 = vmatpush1.msra.mxu0 0.0
    %91 = vmatprep.subr.mxu0 0.0
    %92 = vmatpush1.msra.mxu0 0.0
    %93 = vmatprep.subr.mxu0 0.0
    %94 = vmatpush1.msra.mxu0 0.0
    %95 = vmatprep.subr.mxu0 0.0
    %96 = vmatpush1.msra.mxu0 0.0
    %97 = vmatprep.subr.mxu0 0.0
    %98 = vmatpush1.msra.mxu0 0.0
    %99 = vmatprep.subr.mxu0 0.0
    %100 = vmatpush1.msra.mxu0 0.0
    %101 = vmatprep.subr.mxu0 0.0
    %102 = vmatpush1.msra.mxu0 0.0
    %103 = vmatprep.subr.mxu0 0.0
    %104 = vmatpush1.msra.mxu0 0.0
    %105 = vmatprep.subr.mxu0 0.0
    %106 = vmatpush1.msra.mxu0 0.0
    %107 = vmatprep.subr.mxu0 0.0
    %108 = vmatpush1.msra.mxu0 0.0
    %109 = vmatprep.subr.mxu0 0.0
    %110 = vmatpush1.msra.mxu0 0.0
    %111 = vmatprep.subr.mxu0 0.0
    %112 = vmatpush1.msra.mxu0 0.0
    %113 = vmatprep.subr.mxu0 0.0
    %114 = vmatpush1.msra.mxu0 0.0
    %115 = vmatprep.subr.mxu0 0.0
    %116 = vmatpush1.msra.mxu0 0.0
    %117 = vmatprep.subr.mxu0 0.0
    %118 = vmatpush1.msra.mxu0 0.0
    %119 = vmatprep.subr.mxu0 0.0
    %120 = vmatpush1.msra.mxu0 0.0
    %121 = vmatprep.mubr.f32.mxu0 0.0
    %122 = vmatmul.mubr.f32.gmra.mrb[0].mxu0 %v55
    %v123 = vpop.f32.mrb[0].mxu0
    %v124 = vadd.f32 %v51, %v123
    %v125 = vpop.f32.mrb[0].mxu0
    %126 = vdwg.mxu0
    %v127 = vsub.f32 0.0, %v124
    %v128 = vmul.f32 %v127, 1.442695
    %v129 = vpow.pop %v128
    %v130 = vadd.f32 %v129, 1.0
    %v131 = vrcp.pop %v130
    %132 = vst [vmem:[#allocation7] sm:$0xff] %v131
    // Predicated region
    $region22: #{tpu_custom_call.1} parent=1 // pred_check
      _
    $region23: #{tpu_custom_call.1} parent=1 // pred_check_branch
      %134 = sbr.rel (0) target = $region25
    $region24: #{tpu_custom_call.1} parent=1 // pred_region
      %s136 = ssub.s32 128, 128
      %137 = vsyncadd [#allocation4], %s136
      %s139 = sshll.u32 [#allocation7], 4
      %s140 = int_to_ptr.vmem [resolvable:$true] %s139
      %142 = dma.vmem_to_hbm [thread:$0]  %s140, 128, %s3, [#allocation4]
    $region25: #{tpu_custom_call.1} parent=1 // pred_fallthru
      _
    // Predicated region
    $region26: #{tpu_custom_call.1} parent=1 // pred_check
      _
    $region27: #{tpu_custom_call.1} parent=1 // pred_check_branch
      %144 = sbr.rel (0) target = $region29
    $region28: #{tpu_custom_call.1} parent=1 // pred_region
      %145 = dma.done [#allocation4], 128
    $region29: #{tpu_custom_call.1} parent=1 // pred_fallthru
      _
    %146 = vsyncpa [#allocation3], 1
    %147 = vsyncpa [#allocation6], 1
    %148 = vsyncpa [#allocation4], 1

</llo_original>
